<compile_context>
chip_gen: v7x
topology: tpu7x:2x2x1
jax: 0.10.0
libtpu: 0.0.40
codegen_flags: <defaults>
</compile_context>

<pallas_src>
import functools

import jax
import jax.numpy as jnp
from jax.experimental import pallas as pl
from jax.experimental.pallas import tpu as pltpu


def _round_up(x: int, m: int) -> int:
    return ((x + m - 1) // m) * m


def _so2_conv_kernel(xe_ref, xm_ref, wd_ref, b_ref, w1_ref, w2_ref, o_ref, *,
                     approx_silu: bool):
    # --- fc1_dist edge gate: bf16 operands, f32 accumulation, f32 bias -------
    # h lanes per edge: [h_r | h_i | h_r | h_i]  (duplicated columns in wd_pack
    # so the gating below is a plain full-width elementwise multiply).
    h = jnp.dot(xe_ref[...], wd_ref[...], preferred_element_type=jnp.float32)
    h = h + b_ref[...]                                   # (1, W) broadcast, f32
    if approx_silu:
        # SiLU = h * sigmoid(h); exp and approx reciprocal both use the EUP slot.
        h = h * pl.reciprocal(1.0 + jnp.exp(-h), approx=True)
    else:
        h = h * (1.0 / (1.0 + jnp.exp(-h)))

    # --- stage 1: z lanes per edge = [x0*w1r | x0*w1i | x1*w1r | x1*w1i] ------
    z = jnp.dot(xm_ref[...], w1_ref[...], preferred_element_type=jnp.float32)
    g = (z * h).astype(w2_ref.dtype)                     # gate in f32, bf16 for MXU

    # --- stage 2: block-diag combine -> [out_r | out_i] per edge, dense store --
    o_ref[...] = jnp.dot(g, w2_ref[...],
                         preferred_element_type=jnp.float32).astype(o_ref.dtype)


def prepare_so2_params(params, *, pack=4, compute_dtype=jnp.bfloat16):
    """One-time weight packing (hoisted off the per-call path)."""
    C, H = params["w1r"].shape
    De = params["w_dist"].shape[0]
    f32 = jnp.float32

    # fc1_dist: duplicate columns so h comes out as [h_r | h_i | h_r | h_i].
    wd_dup = jnp.concatenate([params["w_dist"], params["w_dist"]], axis=1)  # (De, 4H)
    b_dup = jnp.concatenate([params["b_dist"], params["b_dist"]], axis=0)   # (4H,)

    # stage 1: block-diag over {x0, x1} rows of [w1r | w1i].
    w1_cat = jnp.concatenate([params["w1r"], params["w1i"]], axis=1)        # (C, 2H)
    w1_blk = jnp.kron(jnp.eye(2, dtype=f32), w1_cat)                        # (2C, 4H)

    # stage 2: rows [z0r, z0i, z1r, z1i] -> cols [out_r | out_i]
    #   out_r = z0r*w2r - z1i*w2i ,  out_i = z1r*w2r + z0i*w2i
    zH = jnp.zeros((H, C), f32)
    w2_blk = jnp.concatenate([
        jnp.concatenate([params["w2r"], zH], axis=1),
        jnp.concatenate([zH, params["w2i"]], axis=1),
        jnp.concatenate([zH, params["w2r"]], axis=1),
        jnp.concatenate([-params["w2i"], zH], axis=1),
    ], axis=0)                                                               # (4H, 2C)

    eyeP = jnp.eye(pack, dtype=f32)
    packed = {
        "wd": jnp.kron(eyeP, wd_dup).astype(compute_dtype),   # (P*De, P*4H)
        "b":  jnp.tile(b_dup, pack)[None, :].astype(f32),     # (1, P*4H) f32 bias
        "w1": jnp.kron(eyeP, w1_blk).astype(compute_dtype),   # (P*2C, P*4H)
        "w2": jnp.kron(eyeP, w2_blk).astype(compute_dtype),   # (P*4H, P*2C)
    }
    meta = {"pack": pack, "C": C, "H": H, "De": De, "compute_dtype": compute_dtype}
    return packed, meta


def so2_conv(x_m, x_edge, packed, meta, *, tile_e=2048, approx_silu=True):
    """x_m: (E, 2, C) f32, x_edge: (E, De) f32. Returns (E, 2, C) f32."""
    E, two, C = x_m.shape
    assert two == 2 and C == meta["C"]
    De = x_edge.shape[1]
    assert De == meta["De"]
    P = meta["pack"]
    H = meta["H"]
    cdt = meta["compute_dtype"]

    # Tile size: multiple of 8*P (sublane alignment after edge packing), as big
    # as requested, but capped so the parallel edge axis keeps >=4 grid blocks
    # (feeds both TensorCores on v7x).
    unit = 8 * P
    tile_cap = max(unit, _round_up(pl.cdiv(E, 4), unit))
    te = max(unit, min(_round_up(tile_e, unit), tile_cap))
    n_blocks = pl.cdiv(E, te)
    E_pad = n_blocks * te

    # Per-call glue: bf16 cast + zero pad (free row-major reshapes otherwise).
    xm = x_m.reshape(E, 2 * C).astype(cdt)
    xe = x_edge.astype(cdt)
    if E_pad != E:
        pad = E_pad - E
        xm = jnp.pad(xm, ((0, pad), (0, 0)))
        xe = jnp.pad(xe, ((0, pad), (0, 0)))
    xm = xm.reshape(E_pad // P, P * 2 * C)        # (E_pad/4, 128) for C=16
    xe = xe.reshape(E_pad // P, P * De)           # (E_pad/4, 64)  for De=16

    rows_t = te // P                              # packed rows per grid step
    W = P * 4 * H                                 # gate / stage-1 width (512)
    OW = P * 2 * C                                # packed output width (128)

    kernel = functools.partial(_so2_conv_kernel, approx_silu=approx_silu)
    full = lambda i: (0, 0)                       # weights resident across the grid
    out = pl.pallas_call(
        kernel,
        grid=(n_blocks,),
        in_specs=[
            pl.BlockSpec((rows_t, P * De), lambda i: (i, 0)),      # packed x_edge
            pl.BlockSpec((rows_t, P * 2 * C), lambda i: (i, 0)),   # packed x_m
            pl.BlockSpec((P * De, W), full),                       # wd_pack
            pl.BlockSpec((1, W), full),                            # bias (f32)
            pl.BlockSpec((P * 2 * C, W), full),                    # w1_pack
            pl.BlockSpec((W, OW), full),                           # w2_pack
        ],
        out_specs=pl.BlockSpec((rows_t, OW), lambda i: (i, 0)),    # lane-dense out
        out_shape=jax.ShapeDtypeStruct((E_pad // P, OW), jnp.float32),
        compiler_params=pltpu.CompilerParams(
            dimension_semantics=("parallel",),     # edge axis shards over TCs
            vmem_limit_bytes=32 * 1024 * 1024,
        ),
    )(xe, xm, packed["wd"], packed["b"], packed["w1"], packed["w2"])

    # (E_pad/P, P*2C) is byte-identical to (E_pad, 2, C) row-major.
    return out.reshape(E_pad, 2, C)[:E]


def so2_conv_reference(x_m, x_edge, params, *, compute_dtype=jnp.float32):
    """Pure-JAX reference mirroring the PyTorch forward (act = SiLU), with the
    same matmul-operand casts the kernel uses (bias kept in f32)."""
    H = params["w1r"].shape[1]
    h = jnp.dot(x_edge.astype(compute_dtype), params["w_dist"].astype(compute_dtype),
                preferred_element_type=jnp.float32) + params["b_dist"]
    h = jax.nn.silu(h)
    h = h.reshape(-1, 2, H)

    xm = x_m.astype(compute_dtype)
    w1r = params["w1r"].astype(compute_dtype)
    w2r = params["w2r"].astype(compute_dtype)
    w1i = params["w1i"].astype(compute_dtype)
    w2i = params["w2i"].astype(compute_dtype)

    x_r = jnp.einsum("etc,ch->eth", xm, w1r, preferred_element_type=jnp.float32)
    x_r = x_r * h[:, 0:1, :]
    x_r = jnp.einsum("eth,hc->etc", x_r.astype(compute_dtype), w2r,
                     preferred_element_type=jnp.float32)
    x_i = jnp.einsum("etc,ch->eth", xm, w1i, preferred_element_type=jnp.float32)
    x_i = x_i * h[:, 1:2, :]
    x_i = jnp.einsum("eth,hc->etc", x_i.astype(compute_dtype), w2i,
                     preferred_element_type=jnp.float32)
    x_m_r = x_r[:, 0] - x_i[:, 1]
    x_m_i = x_r[:, 1] + x_i[:, 0]
    return jnp.stack((x_m_r, x_m_i), axis=1)


def init_params(key, edge_channels, num_channels, hidden_channels):
    """Deterministic synthetic init (nn.Linear shapes, stored transposed as
    (in, out) so the kernel computes x @ W)."""
    ks = jax.random.split(key, 6)
    scale = 0.05
    return {
        "w_dist": scale * jax.random.normal(ks[0], (edge_channels, 2 * hidden_channels), jnp.float32),
        "b_dist": scale * jax.random.normal(ks[1], (2 * hidden_channels,), jnp.float32),
        "w1r": scale * jax.random.normal(ks[2], (num_channels, hidden_channels), jnp.float32),
        "w2r": scale * jax.random.normal(ks[3], (hidden_channels, num_channels), jnp.float32),
        "w1i": scale * jax.random.normal(ks[4], (num_channels, hidden_channels), jnp.float32),
        "w2i": scale * jax.random.normal(ks[5], (hidden_channels, num_channels), jnp.float32),
    }


if __name__ == "__main__":
    # Module hyperparameters (small, consistent with SO2Conv semantics)
    m = 1
    sphere_channels = 4
    hidden_channels = 32
    edge_channels = 16
    lmax = 4
    mmax = 2
    num_coefficients = lmax - m + 1                      # mmax >= m
    num_channels = num_coefficients * sphere_channels    # = 16

    E = 200  # number of edges (not a tile multiple -> exercises padding path)

    key = jax.random.PRNGKey(0)
    k_xm, k_xe, k_p = jax.random.split(key, 3)
    x_m = jax.random.normal(k_xm, (E, 2, num_channels), jnp.float32)
    x_edge = jax.random.normal(k_xe, (E, edge_channels), jnp.float32)
    params = init_params(k_p, edge_channels, num_channels, hidden_channels)

    # One-time weight packing; per-call wrapper only casts/pads the activations.
    packed, meta = prepare_so2_params(params)

    # tile_e defaults to 2048 but is adaptively capped so the toy E=200 still
    # yields a 4-step grid (exercises multi-block + padding paths).
    fwd = jax.jit(lambda xm, xe: so2_conv(xm, xe, packed, meta))
    out = jax.block_until_ready(fwd(x_m, x_edge))
    assert out.shape == (E, 2, num_channels)

    # Compare against a reference applying the same bf16 operand casts
    # (f32 accumulation, f32 bias); remaining delta is the approx reciprocal.
    ref = so2_conv_reference(x_m, x_edge, params, compute_dtype=jnp.bfloat16)
    max_err = float(jnp.max(jnp.abs(out - ref)))
    assert jnp.allclose(out, ref, atol=2e-4, rtol=2e-2), (
        f"mismatch vs reference: max abs diff = {max_err}")

    print("KERNEL_OK")
</pallas_src>

<mosaic_0001>
module attributes {stable_mosaic.version = 11 : i64} {
  func.func @_so2_conv_kernel(%arg0: i32, %arg1: memref<16x64xbf16, #tpu.memory_space<vmem>>, %arg2: memref<16x128xbf16, #tpu.memory_space<vmem>>, %arg3: memref<64x512xbf16, #tpu.memory_space<vmem>>, %arg4: memref<1x512xf32, #tpu.memory_space<vmem>>, %arg5: memref<128x512xbf16, #tpu.memory_space<vmem>>, %arg6: memref<512x128xbf16, #tpu.memory_space<vmem>>, %arg7: memref<16x128xf32, #tpu.memory_space<vmem>>) attributes {dimension_semantics = [#tpu.dimension_semantics<parallel>], iteration_bounds = array<i64: 4>, scalar_prefetch = 0 : i64, scratch_operands = 0 : i64, tpu.core_type = #tpu.core_type<tc>, window_params = [{transform_indices = @transform_0, window_bounds = array<i64: 16, 64>}, {transform_indices = @transform_1, window_bounds = array<i64: 16, 128>}, {pipeline_mode = #tpu.pipeline_mode<synchronous>, transform_indices = @transform_2, window_bounds = array<i64: 64, 512>}, {pipeline_mode = #tpu.pipeline_mode<synchronous>, transform_indices = @transform_3, window_bounds = array<i64: 1, 512>}, {pipeline_mode = #tpu.pipeline_mode<synchronous>, transform_indices = @transform_4, window_bounds = array<i64: 128, 512>}, {pipeline_mode = #tpu.pipeline_mode<synchronous>, transform_indices = @transform_5, window_bounds = array<i64: 512, 128>}, {transform_indices = @transform_6, window_bounds = array<i64: 16, 128>}]} {
    %c0 = arith.constant 0 : index
    %c0_0 = arith.constant 0 : index
    %0 = vector.load %arg1[%c0, %c0_0] : memref<16x64xbf16, #tpu.memory_space<vmem>>, vector<16x64xbf16>
    %c0_1 = arith.constant 0 : index
    %c0_2 = arith.constant 0 : index
    %1 = vector.load %arg3[%c0_1, %c0_2] : memref<64x512xbf16, #tpu.memory_space<vmem>>, vector<64x512xbf16>
    %cst = arith.constant dense<0.000000e+00> : vector<16x512xf32>
    %2 = tpu.matmul %0, %1, %cst {dimension_numbers = #tpu.dot_dimension_numbers<[1], [0], [0], [1], [0, 0, 1, 1], [], []>} : vector<16x64xbf16>, vector<64x512xbf16>, vector<16x512xf32> -> vector<16x512xf32>
    %c0_3 = arith.constant 0 : index
    %c0_4 = arith.constant 0 : index
    %3 = vector.load %arg4[%c0_3, %c0_4] : memref<1x512xf32, #tpu.memory_space<vmem>>, vector<1x512xf32>
    %4 = vector.broadcast %3 : vector<1x512xf32> to vector<16x512xf32>
    %5 = arith.addf %2, %4 : vector<16x512xf32>
    %cst_5 = arith.constant 0.000000e+00 : f32
    %6 = vector.broadcast %cst_5 : f32 to vector<16x512xf32>
    %7 = arith.subf %6, %5 : vector<16x512xf32>
    %8 = math.exp %7 : vector<16x512xf32>
    %cst_6 = arith.constant 1.000000e+00 : f32
    %9 = vector.broadcast %cst_6 : f32 to vector<16x512xf32>
    %10 = arith.addf %9, %8 : vector<16x512xf32>
    %11 = tpu.reciprocal %10 {approx = true} : vector<16x512xf32> -> vector<16x512xf32>
    %12 = arith.mulf %5, %11 : vector<16x512xf32>
    %c0_7 = arith.constant 0 : index
    %c0_8 = arith.constant 0 : index
    %13 = vector.load %arg2[%c0_7, %c0_8] : memref<16x128xbf16, #tpu.memory_space<vmem>>, vector<16x128xbf16>
    %c0_9 = arith.constant 0 : index
    %c0_10 = arith.constant 0 : index
    %14 = vector.load %arg5[%c0_9, %c0_10] : memref<128x512xbf16, #tpu.memory_space<vmem>>, vector<128x512xbf16>
    %cst_11 = arith.constant dense<0.000000e+00> : vector<16x512xf32>
    %15 = tpu.matmul %13, %14, %cst_11 {dimension_numbers = #tpu.dot_dimension_numbers<[1], [0], [0], [1], [0, 0, 1, 1], [], []>} : vector<16x128xbf16>, vector<128x512xbf16>, vector<16x512xf32> -> vector<16x512xf32>
    %16 = arith.mulf %15, %12 : vector<16x512xf32>
    %17 = arith.truncf %16 : vector<16x512xf32> to vector<16x512xbf16>
    %c0_12 = arith.constant 0 : index
    %c0_13 = arith.constant 0 : index
    %18 = vector.load %arg6[%c0_12, %c0_13] : memref<512x128xbf16, #tpu.memory_space<vmem>>, vector<512x128xbf16>
    %cst_14 = arith.constant dense<0.000000e+00> : vector<16x128xf32>
    %19 = tpu.matmul %17, %18, %cst_14 {dimension_numbers = #tpu.dot_dimension_numbers<[1], [0], [0], [1], [0, 0, 1, 1], [], []>} : vector<16x512xbf16>, vector<512x128xbf16>, vector<16x128xf32> -> vector<16x128xf32>
    %c0_15 = arith.constant 0 : index
    %c0_16 = arith.constant 0 : index
    %20 = vector.load %arg7[%c0_15, %c0_16] : memref<16x128xf32, #tpu.memory_space<vmem>>, vector<16x128xf32>
    tpu.vector_store %arg7[%c0_15, %c0_16], %19 {strides = array<i32>} : memref<16x128xf32, #tpu.memory_space<vmem>>, vector<16x128xf32>,
    return
  }
  func.func @transform_0(%arg0: i32) -> (i32, i32) {
    %c0_i32 = arith.constant 0 : i32
    %c0_i32_0 = arith.constant 0 : i32
    return %arg0, %c0_i32 : i32, i32
  }
  func.func @transform_1(%arg0: i32) -> (i32, i32) {
    %c0_i32 = arith.constant 0 : i32
    %c0_i32_0 = arith.constant 0 : i32
    return %arg0, %c0_i32 : i32, i32
  }
  func.func @transform_2(%arg0: i32) -> (i32, i32) {
    %c0_i32 = arith.constant 0 : i32
    %c0_i32_0 = arith.constant 0 : i32
    %c0_i32_1 = arith.constant 0 : i32
    return %c0_i32, %c0_i32_0 : i32, i32
  }
  func.func @transform_3(%arg0: i32) -> (i32, i32) {
    %c0_i32 = arith.constant 0 : i32
    %c0_i32_0 = arith.constant 0 : i32
    %c0_i32_1 = arith.constant 0 : i32
    return %c0_i32, %c0_i32_0 : i32, i32
  }
  func.func @transform_4(%arg0: i32) -> (i32, i32) {
    %c0_i32 = arith.constant 0 : i32
    %c0_i32_0 = arith.constant 0 : i32
    %c0_i32_1 = arith.constant 0 : i32
    return %c0_i32, %c0_i32_0 : i32, i32
  }
  func.func @transform_5(%arg0: i32) -> (i32, i32) {
    %c0_i32 = arith.constant 0 : i32
    %c0_i32_0 = arith.constant 0 : i32
    %c0_i32_1 = arith.constant 0 : i32
    return %c0_i32, %c0_i32_0 : i32, i32
  }
  func.func @transform_6(%arg0: i32) -> (i32, i32) {
    %c0_i32 = arith.constant 0 : i32
    %c0_i32_0 = arith.constant 0 : i32
    return %arg0, %c0_i32 : i32, i32
  }
}

</mosaic_0001>

<llo_original>
// kernel: _lambda_.1
$region0: #{_lambda_.1}
  #allocation0 [shape = 'u32[]', space=smem, size = 0x4, offset = 0x4, fixed_abs, tag = 'smem constant byte address 0x4 - core index']
  #allocation1 [shape = 'u32[144,128]{1,0:T(1,128)}', space=vmem, size = 0x12000, scoped, tag = 'internal scratch']
  %s0 = inlined_call_operand.vmem [shape: bf16[64,64], index: 0, kind: input, shape index: {}]
  %s1 = inlined_call_operand.vmem [shape: bf16[64,128], index: 1, kind: input, shape index: {}]
  %s2 = inlined_call_operand.vmem [shape: bf16[64,512], index: 2, kind: input, shape index: {}]
  %s3 = inlined_call_operand.vmem [shape: f32[1,512], index: 3, kind: input, shape index: {}]
  %s4 = inlined_call_operand.vmem [shape: bf16[128,512], index: 4, kind: input, shape index: {}]
  %s5 = inlined_call_operand.vmem [shape: bf16[512,128], index: 5, kind: input, shape index: {}]
  %s6 = inlined_call_operand.vmem [shape: f32[64,128], index: 6, kind: output, shape index: {}]
  %s7 = sld [smem:[#allocation0]]
  $region57: #{_lambda_.1} parent=0
    _
  %s9 = ssub.s32 1, %s7
  %s10 = scalar_select 0, %s9, %s7
  loop: start=0, step=1, limit=6
  $region2: #{_lambda_.1} parent=0 // loop_pre_header
    _
  $region3: #{_lambda_.1} parent=0 // loop_header
    %s12 = sphi 0, %s16
    %p13 = scmp.ge.s32.totalorder %s12, 6
    %s22 = sphi 0, %s24
    %s25 = sphi 0, %s22
    %s26 = sphi 0, %s25
    %s42 = sphi 0, %s26
    %s48 = sphi 0, %s50
    %s51 = sphi 0, %s48
    %s52 = sphi 0, %s51
    %s68 = sphi 0, %s52
    %s72 = sphi 0, %s72
    %s74 = sphi 0, %s72
    %s75 = sphi 0, %s74
    %s89 = sphi 0, %s75
    %s93 = sphi 0, %s93
    %s95 = sphi 0, %s93
    %s96 = sphi 0, %s95
    %s110 = sphi 0, %s96
    %s114 = sphi 0, %s114
    %s116 = sphi 0, %s114
    %s117 = sphi 0, %s116
    %s131 = sphi 0, %s117
    %s135 = sphi 0, %s135
    %s137 = sphi 0, %s135
    %s138 = sphi 0, %s137
    %s152 = sphi 0, %s138
    %s158 = sphi 0, %s160
    %s161 = sphi 0, %s158
    %s162 = sphi 0, %s161
    %s178 = sphi 0, %s162
  $region4: #{_lambda_.1} parent=0 // loop_header_branch
    %15 = sbr.rel (%p13) target = $region8
  $region5: #{_lambda_.1} parent=0 // loop_body
    %s17 = ssub.s32 %s12, 1
    %s18 = ssub.s32 %s12, 2
    %s19 = sadd.s32 %s12, 1
    %s20 = ssub.s32 %s12, %s19
    %p21 = scmp.eq.s32.totalorder %s20, 0
    %s23 = sadd.s32 %s22, 1
    %s24 = scalar_select %p21, %s22, %s23
    %p27 = pneg %p21
    %p28 = scmp.eq.s32.totalorder %s12, 3
    %p29 = por %p27, %p28
    %p30 = scmp.ne.s32.totalorder %s22, %s25
    %p31 = scmp.eq.s32.totalorder %s12, 0
    %p32 = por %p30, %p31
    %p33 = scmp.ne.s32.totalorder %s22, %s25
    %p34 = scmp.eq.s32.totalorder %s17, 3
    %p35 = por %p33, %p34
    %p36 = scmp.ne.s32.totalorder %s25, %s26
    %p37 = scmp.eq.s32.totalorder %s17, 0
    %p38 = por %p36, %p37
    %p39 = scmp.ne.s32.totalorder %s25, %s26
    %p40 = scmp.eq.s32.totalorder %s18, 3
    %p41 = por %p39, %p40
    %p43 = scmp.ne.s32.totalorder %s26, %s42
    %p44 = scmp.eq.s32.totalorder %s18, 0
    %p45 = por %p43, %p44
    %s46 = ssub.s32 %s12, %s19
    %p47 = scmp.eq.s32.totalorder %s46, 0
    %s49 = sadd.s32 %s48, 1
    %s50 = scalar_select %p47, %s48, %s49
    %p53 = pneg %p47
    %p54 = scmp.eq.s32.totalorder %s12, 3
    %p55 = por %p53, %p54
    %p56 = scmp.ne.s32.totalorder %s48, %s51
    %p57 = scmp.eq.s32.totalorder %s12, 0
    %p58 = por %p56, %p57
    %p59 = scmp.ne.s32.totalorder %s48, %s51
    %p60 = scmp.eq.s32.totalorder %s17, 3
    %p61 = por %p59, %p60
    %p62 = scmp.ne.s32.totalorder %s51, %s52
    %p63 = scmp.eq.s32.totalorder %s17, 0
    %p64 = por %p62, %p63
    %p65 = scmp.ne.s32.totalorder %s51, %s52
    %p66 = scmp.eq.s32.totalorder %s18, 3
    %p67 = por %p65, %p66
    %p69 = scmp.ne.s32.totalorder %s52, %s68
    %p70 = scmp.eq.s32.totalorder %s18, 0
    %p71 = por %p69, %p70
    %s73 = sadd.s32 %s72, 1
    %p76 = scmp.eq.s32.totalorder %s12, 3
    %p77 = scmp.ne.s32.totalorder %s72, %s74
    %p78 = scmp.eq.s32.totalorder %s12, 0
    %p79 = por %p77, %p78
    %p80 = scmp.ne.s32.totalorder %s72, %s74
    %p81 = scmp.eq.s32.totalorder %s17, 3
    %p82 = por %p80, %p81
    %p83 = scmp.ne.s32.totalorder %s74, %s75
    %p84 = scmp.eq.s32.totalorder %s17, 0
    %p85 = por %p83, %p84
    %p86 = scmp.ne.s32.totalorder %s74, %s75
    %p87 = scmp.eq.s32.totalorder %s18, 3
    %p88 = por %p86, %p87
    %p90 = scmp.ne.s32.totalorder %s75, %s89
    %p91 = scmp.eq.s32.totalorder %s18, 0
    %p92 = por %p90, %p91
    %s94 = sadd.s32 %s93, 1
    %p97 = scmp.eq.s32.totalorder %s12, 3
    %p98 = scmp.ne.s32.totalorder %s93, %s95
    %p99 = scmp.eq.s32.totalorder %s12, 0
    %p100 = por %p98, %p99
    %p101 = scmp.ne.s32.totalorder %s93, %s95
    %p102 = scmp.eq.s32.totalorder %s17, 3
    %p103 = por %p101, %p102
    %p104 = scmp.ne.s32.totalorder %s95, %s96
    %p105 = scmp.eq.s32.totalorder %s17, 0
    %p106 = por %p104, %p105
    %p107 = scmp.ne.s32.totalorder %s95, %s96
    %p108 = scmp.eq.s32.totalorder %s18, 3
    %p109 = por %p107, %p108
    %p111 = scmp.ne.s32.totalorder %s96, %s110
    %p112 = scmp.eq.s32.totalorder %s18, 0
    %p113 = por %p111, %p112
    %s115 = sadd.s32 %s114, 1
    %p118 = scmp.eq.s32.totalorder %s12, 3
    %p119 = scmp.ne.s32.totalorder %s114, %s116
    %p120 = scmp.eq.s32.totalorder %s12, 0
    %p121 = por %p119, %p120
    %p122 = scmp.ne.s32.totalorder %s114, %s116
    %p123 = scmp.eq.s32.totalorder %s17, 3
    %p124 = por %p122, %p123
    %p125 = scmp.ne.s32.totalorder %s116, %s117
    %p126 = scmp.eq.s32.totalorder %s17, 0
    %p127 = por %p125, %p126
    %p128 = scmp.ne.s32.totalorder %s116, %s117
    %p129 = scmp.eq.s32.totalorder %s18, 3
    %p130 = por %p128, %p129
    %p132 = scmp.ne.s32.totalorder %s117, %s131
    %p133 = scmp.eq.s32.totalorder %s18, 0
    %p134 = por %p132, %p133
    %s136 = sadd.s32 %s135, 1
    %p139 = scmp.eq.s32.totalorder %s12, 3
    %p140 = scmp.ne.s32.totalorder %s135, %s137
    %p141 = scmp.eq.s32.totalorder %s12, 0
    %p142 = por %p140, %p141
    %p143 = scmp.ne.s32.totalorder %s135, %s137
    %p144 = scmp.eq.s32.totalorder %s17, 3
    %p145 = por %p143, %p144
    %p146 = scmp.ne.s32.totalorder %s137, %s138
    %p147 = scmp.eq.s32.totalorder %s17, 0
    %p148 = por %p146, %p147
    %p149 = scmp.ne.s32.totalorder %s137, %s138
    %p150 = scmp.eq.s32.totalorder %s18, 3
    %p151 = por %p149, %p150
    %p153 = scmp.ne.s32.totalorder %s138, %s152
    %p154 = scmp.eq.s32.totalorder %s18, 0
    %p155 = por %p153, %p154
    %s156 = ssub.s32 %s12, %s19
    %p157 = scmp.eq.s32.totalorder %s156, 0
    %s159 = sadd.s32 %s158, 1
    %s160 = scalar_select %p157, %s158, %s159
    %p163 = pneg %p157
    %p164 = scmp.eq.s32.totalorder %s12, 3
    %p165 = por %p163, %p164
    %p166 = scmp.ne.s32.totalorder %s158, %s161
    %p167 = scmp.eq.s32.totalorder %s12, 0
    %p168 = por %p166, %p167
    %p169 = scmp.ne.s32.totalorder %s158, %s161
    %p170 = scmp.eq.s32.totalorder %s17, 3
    %p171 = por %p169, %p170
    %p172 = scmp.ne.s32.totalorder %s161, %s162
    %p173 = scmp.eq.s32.totalorder %s17, 0
    %p174 = por %p172, %p173
    %p175 = scmp.ne.s32.totalorder %s161, %s162
    %p176 = scmp.eq.s32.totalorder %s18, 3
    %p177 = por %p175, %p176
    %p179 = scmp.ne.s32.totalorder %s162, %s178
    %p180 = scmp.eq.s32.totalorder %s18, 0
    %p181 = por %p179, %p180
    %p182 = scmp.le.s32.totalorder 1, %s12
    %p183 = scmp.lt.s32.totalorder %s12, 5
    %p184 = pnand %p182, %p183
    %p185 = pneg %p184
    // Predicated region
    $region9: #{_lambda_.1} parent=5 // pred_check
      _
    $region10: #{_lambda_.1} parent=5 // pred_check_branch
      %187 = sbr.rel (%p184) target = $region12
    $region11: #{_lambda_.1} parent=5 // pred_region
      %s188 = ssub.s32 %s12, 1
      // Predicated region
      $region13: #{_lambda_.1} parent=11 // pred_check
        %p189 = pneg %p85
      $region14: #{_lambda_.1} parent=11 // pred_check_branch
        %191 = sbr.rel (%p189) target = $region16
      $region15: #{_lambda_.1} parent=11 // pred_region
        _
      $region16: #{_lambda_.1} parent=11 // pred_fallthru
        _
      // Predicated region
      $region17: #{_lambda_.1} parent=11 // pred_check
        %p192 = pneg %p106
      $region18: #{_lambda_.1} parent=11 // pred_check_branch
        %194 = sbr.rel (%p192) target = $region20
      $region19: #{_lambda_.1} parent=11 // pred_region
        _
      $region20: #{_lambda_.1} parent=11 // pred_fallthru
        _
      // Predicated region
      $region21: #{_lambda_.1} parent=11 // pred_check
        %p195 = pneg %p127
      $region22: #{_lambda_.1} parent=11 // pred_check_branch
        %197 = sbr.rel (%p195) target = $region24
      $region23: #{_lambda_.1} parent=11 // pred_region
        _
      $region24: #{_lambda_.1} parent=11 // pred_fallthru
        _
      // Predicated region
      $region25: #{_lambda_.1} parent=11 // pred_check
        %p198 = pneg %p148
      $region26: #{_lambda_.1} parent=11 // pred_check_branch
        %200 = sbr.rel (%p198) target = $region28
      $region27: #{_lambda_.1} parent=11 // pred_region
        _
      $region28: #{_lambda_.1} parent=11 // pred_fallthru
        _
    $region12: #{_lambda_.1} parent=5 // pred_fallthru
      _
    %p201 = scmp.lt.s32.totalorder %s12, 4
    // Predicated region
    $region29: #{_lambda_.1} parent=5 // pred_check
      %p202 = pneg %p201
    $region30: #{_lambda_.1} parent=5 // pred_check_branch
      %204 = sbr.rel (%p202) target = $region32
    $region31: #{_lambda_.1} parent=5 // pred_region
      // Predicated region
      $region33: #{_lambda_.1} parent=31 // pred_check
        %p205 = pneg %p32
      $region34: #{_lambda_.1} parent=31 // pred_check_branch
        %207 = sbr.rel (%p205) target = $region36
      $region35: #{_lambda_.1} parent=31 // pred_region
        %s208 = smul.u32 2, %s12
        %p209 = scmp.lt.s32.totalorder %s208, 7
        %s210 = scalar_select %p209, %s208, 7
        %s211 = smul.addr %s210, 4
        %s212 = scalar_lea.vmem %s0, %s211
        %s213 = smul.u32 2, %s12
      $region36: #{_lambda_.1} parent=31 // pred_fallthru
        _
      // Predicated region
      $region37: #{_lambda_.1} parent=31 // pred_check
        %p214 = pneg %p58
      $region38: #{_lambda_.1} parent=31 // pred_check_branch
        %216 = sbr.rel (%p214) target = $region40
      $region39: #{_lambda_.1} parent=31 // pred_region
        %s217 = smul.u32 2, %s12
        %p218 = scmp.lt.s32.totalorder %s217, 7
        %s219 = scalar_select %p218, %s217, 7
        %s220 = smul.addr %s219, 4
        %s221 = scalar_lea.vmem %s1, %s220
        %s222 = smul.u32 2, %s12
      $region40: #{_lambda_.1} parent=31 // pred_fallthru
        _
    $region32: #{_lambda_.1} parent=5 // pred_fallthru
      _
    %p223 = scmp.le.s32.totalorder 1, %s12
    %p224 = scmp.lt.s32.totalorder %s12, 5
    %p225 = pnand %p223, %p224
    %p226 = pneg %p225
    // Predicated region
    $region41: #{_lambda_.1} parent=5 // pred_check
      _
    $region42: #{_lambda_.1} parent=5 // pred_check_branch
      %228 = sbr.rel (%p225) target = $region44
    $region43: #{_lambda_.1} parent=5 // pred_region
      %s229 = ssub.s32 %s12, 1
      %s230 = smul.u32 2, %s17
      %p231 = scmp.lt.s32.totalorder %s230, 7
      %s232 = scalar_select %p231, %s230, 7
      %s233 = smul.addr %s232, 4
      %s234 = scalar_lea.vmem %s0, %s233
      %p235 = pneg %p38
      %p236 = pneg %p35
      %s237 = smul.u32 2, %s17
      %p238 = scmp.lt.s32.totalorder %s237, 7
      %s239 = scalar_select %p238, %s237, 7
      %s240 = smul.addr %s239, 4
      %s241 = scalar_lea.vmem %s1, %s240
      %p242 = pneg %p64
      %p243 = pneg %p61
      %p244 = pneg %p85
      %p245 = pneg %p82
      %p246 = pneg %p106
      %p247 = pneg %p103
      %p248 = pneg %p127
      %p249 = pneg %p124
      %p250 = pneg %p148
      %p251 = pneg %p145
      %p252 = pneg %p174
      %p253 = pneg %p171
      %s254 = smul.u32 2, %s17
      %p255 = scmp.lt.s32.totalorder %s254, 7
      %s256 = scalar_select %p255, %s254, 7
      %s257 = smul.addr %s256, 8
      %s258 = scalar_lea.vmem %s6, %s257
      %s259 = smul.u32 2, %s17
      %p260 = scmp.lt.s32.totalorder %s259, 7
      %s261 = scalar_select %p260, %s259, 7
      %s262 = smul.addr %s261, 4
      %s263 = scalar_lea.vmem %s0, %s262
      %s264 = smul.u32 2, %s17
      %s265 = smul.u32 2, %s17
      %p266 = scmp.lt.s32.totalorder %s265, 7
      %s267 = scalar_select %p266, %s265, 7
      %s268 = smul.addr %s267, 4
      %s269 = scalar_lea.vmem %s1, %s268
      %s270 = smul.u32 2, %s17
      %s271 = smul.u32 2, %s17
      %p272 = scmp.lt.s32.totalorder %s271, 7
      %s273 = scalar_select %p272, %s271, 7
      %s274 = smul.addr %s273, 8
      %s275 = scalar_lea.vmem %s6, %s274
      %s276 = smul.u32 2, %s17
      %v278 = vld [vmem:[%s263] sm:$0xf]
      %v279 = vld [vmem:[%s263 + $0x4] sm:$0xf]
      %v280 = vld [vmem:[%s2] sm:$0xff]
      %v281 = vld [vmem:[%s2 + $0x8] sm:$0xff]
      %v282 = vld [vmem:[%s2 + $0x10] sm:$0xff]
      %v283 = vld [vmem:[%s2 + $0x18] sm:$0xff]
      %v284 = vld [vmem:[%s2 + $0x20] sm:$0xff]
      %v285 = vld [vmem:[%s2 + $0x28] sm:$0xff]
      %v286 = vld [vmem:[%s2 + $0x30] sm:$0xff]
      %v287 = vld [vmem:[%s2 + $0x38] sm:$0xff]
      %v288 = vld [vmem:[%s2 + $0x40] sm:$0xff]
      %v289 = vld [vmem:[%s2 + $0x48] sm:$0xff]
      %v290 = vld [vmem:[%s2 + $0x50] sm:$0xff]
      %v291 = vld [vmem:[%s2 + $0x58] sm:$0xff]
      %v292 = vld [vmem:[%s2 + $0x60] sm:$0xff]
      %v293 = vld [vmem:[%s2 + $0x68] sm:$0xff]
      %v294 = vld [vmem:[%s2 + $0x70] sm:$0xff]
      %v295 = vld [vmem:[%s2 + $0x78] sm:$0xff]
      %v296 = vld [vmem:[%s3] sm:$0xf]
      %v298 = vlaneseq
      %v299 = vshrl.u32 %v298, 7
      %v300 = vsub.s32 0, %v299
      %v301 = vrot.slane %v296, %v300
      %v302 = vlaneseq
      %v303 = vshrl.u32 %v302, 7
      %v304 = vsub.s32 1, %v303
      %v305 = vrot.slane %v296, %v304
      %v306 = vlaneseq
      %v307 = vshrl.u32 %v306, 7
      %v308 = vsub.s32 2, %v307
      %v309 = vrot.slane %v296, %v308
      %v310 = vlaneseq
      %v311 = vshrl.u32 %v310, 7
      %v312 = vsub.s32 3, %v311
      %v313 = vrot.slane %v296, %v312
      %v320 = vunpack.c.l.b16 %v278
      %v321 = vunpack.c.l.b16 %v279
      %v322 = vpack.c.b16 %v321, %v320
      %v339 = vunpack.c.l.b16 %v280
      %v340 = vunpack.c.h.b16 %v280
      %v341 = vunpack.c.l.b16 %v281
      %v342 = vunpack.c.h.b16 %v281
      %v343 = vunpack.c.l.b16 %v282
      %v344 = vunpack.c.h.b16 %v282
      %v345 = vunpack.c.l.b16 %v283
      %v346 = vunpack.c.h.b16 %v283
      %v347 = vunpack.c.l.b16 %v284
      %v348 = vunpack.c.h.b16 %v284
      %v349 = vunpack.c.l.b16 %v285
      %v350 = vunpack.c.h.b16 %v285
      %v351 = vunpack.c.l.b16 %v286
      %v352 = vunpack.c.h.b16 %v286
      %v353 = vunpack.c.l.b16 %v287
      %v354 = vunpack.c.h.b16 %v287
      %v355 = vunpack.c.l.b16 %v288
      %v356 = vunpack.c.h.b16 %v288
      %v357 = vunpack.c.l.b16 %v289
      %v358 = vunpack.c.h.b16 %v289
      %v359 = vunpack.c.l.b16 %v290
      %v360 = vunpack.c.h.b16 %v290
      %v361 = vunpack.c.l.b16 %v291
      %v362 = vunpack.c.h.b16 %v291
      %v363 = vunpack.c.l.b16 %v292
      %v364 = vunpack.c.h.b16 %v292
      %v365 = vunpack.c.l.b16 %v293
      %v366 = vunpack.c.h.b16 %v293
      %v367 = vunpack.c.l.b16 %v294
      %v368 = vunpack.c.h.b16 %v294
      %v369 = vunpack.c.l.b16 %v295
      %v370 = vunpack.c.h.b16 %v295
      %v371 = vpack.c.b16 %v343, %v339
      %v372 = vpack.c.b16 %v344, %v340
      %v373 = vpack.c.b16 %v345, %v341
      %v374 = vpack.c.b16 %v346, %v342
      %v375 = vpack.c.b16 %v351, %v347
      %v376 = vpack.c.b16 %v352, %v348
      %v377 = vpack.c.b16 %v353, %v349
      %v378 = vpack.c.b16 %v354, %v350
      %v379 = vpack.c.b16 %v359, %v355
      %v380 = vpack.c.b16 %v360, %v356
      %v381 = vpack.c.b16 %v361, %v357
      %v382 = vpack.c.b16 %v362, %v358
      %v383 = vpack.c.b16 %v367, %v363
      %v384 = vpack.c.b16 %v368, %v364
      %v385 = vpack.c.b16 %v369, %v365
      %v386 = vpack.c.b16 %v370, %v366
      %vm403 = vcmask 523264
      %v405 = vsel %vm403, %v322, 0
      %407 = vmatprep.subr.bf16.mxu0 %v372
      %408 = vmatpush1.bf16.msra.mxu0 %v371
      %409 = vmatprep.subr.bf16.mxu0 %v376
      %410 = vmatpush1.bf16.msra.mxu0 %v375
      %411 = vmatprep.subr.bf16.mxu0 %v380
      %412 = vmatpush1.bf16.msra.mxu0 %v379
      %413 = vmatprep.subr.bf16.mxu0 %v384
      %414 = vmatpush1.bf16.msra.mxu0 %v383
      %415 = vmatprep.subr.bf16.mxu0 0
      %416 = vmatpush1.bf16.msra.mxu0 0
      %417 = vmatprep.subr.bf16.mxu0 0
      %418 = vmatpush1.bf16.msra.mxu0 0
      %419 = vmatprep.subr.bf16.mxu0 0
      %420 = vmatpush1.bf16.msra.mxu0 0
      %421 = vmatprep.subr.bf16.mxu0 0
      %422 = vmatpush1.bf16.msra.mxu0 0
      %423 = vmatprep.subr.bf16.mxu0 0
      %424 = vmatpush1.bf16.msra.mxu0 0
      %425 = vmatprep.subr.bf16.mxu0 0
      %426 = vmatpush1.bf16.msra.mxu0 0
      %427 = vmatprep.subr.bf16.mxu0 0
      %428 = vmatpush1.bf16.msra.mxu0 0
      %429 = vmatprep.subr.bf16.mxu0 0
      %430 = vmatpush1.bf16.msra.mxu0 0
      %431 = vmatprep.subr.bf16.mxu0 0
      %432 = vmatpush1.bf16.msra.mxu0 0
      %433 = vmatprep.subr.bf16.mxu0 0
      %434 = vmatpush1.bf16.msra.mxu0 0
      %435 = vmatprep.subr.bf16.mxu0 0
      %436 = vmatpush1.bf16.msra.mxu0 0
      %437 = vmatprep.subr.bf16.mxu0 0
      %438 = vmatpush1.bf16.msra.mxu0 0
      %439 = vmatprep.mubr.bf16.mxu0 0
      %440 = vmatmul.mubr.bf16.gmra.mrb[0].mxu0 %v405
      %v441 = vpop.f32.mrb[0].mxu0
      %v442 = vadd.f32 %v301, %v441
      %v443 = vpop.f32.mrb[0].mxu0
      %v444 = vadd.f32 %v305, %v443
      %v445 = vpop.f32.mrb[0].mxu0
      %v446 = vadd.f32 %v301, %v445
      %v447 = vpop.f32.mrb[0].mxu0
      %v448 = vadd.f32 %v305, %v447
      %449 = vdwg.mxu0
      %450 = vmatprep.subr.bf16.mxu0 %v374
      %451 = vmatpush1.bf16.msra.mxu0 %v373
      %452 = vmatprep.subr.bf16.mxu0 %v378
      %453 = vmatpush1.bf16.msra.mxu0 %v377
      %454 = vmatprep.subr.bf16.mxu0 %v382
      %455 = vmatpush1.bf16.msra.mxu0 %v381
      %456 = vmatprep.subr.bf16.mxu0 %v386
      %457 = vmatpush1.bf16.msra.mxu0 %v385
      %458 = vmatprep.subr.bf16.mxu0 0
      %459 = vmatpush1.bf16.msra.mxu0 0
      %460 = vmatprep.subr.bf16.mxu0 0
      %461 = vmatpush1.bf16.msra.mxu0 0
      %462 = vmatprep.subr.bf16.mxu0 0
      %463 = vmatpush1.bf16.msra.mxu0 0
      %464 = vmatprep.subr.bf16.mxu0 0
      %465 = vmatpush1.bf16.msra.mxu0 0
      %466 = vmatprep.subr.bf16.mxu0 0
      %467 = vmatpush1.bf16.msra.mxu0 0
      %468 = vmatprep.subr.bf16.mxu0 0
      %469 = vmatpush1.bf16.msra.mxu0 0
      %470 = vmatprep.subr.bf16.mxu0 0
      %471 = vmatpush1.bf16.msra.mxu0 0
      %472 = vmatprep.subr.bf16.mxu0 0
      %473 = vmatpush1.bf16.msra.mxu0 0
      %474 = vmatprep.subr.bf16.mxu0 0
      %475 = vmatpush1.bf16.msra.mxu0 0
      %476 = vmatprep.subr.bf16.mxu0 0
      %477 = vmatpush1.bf16.msra.mxu0 0
      %478 = vmatprep.subr.bf16.mxu0 0
      %479 = vmatpush1.bf16.msra.mxu0 0
      %480 = vmatprep.subr.bf16.mxu0 0
      %481 = vmatpush1.bf16.msra.mxu0 0
      %482 = vmatprep.mubr.bf16.mxu0 0
      %483 = vmatmul.mubr.bf16.gmra.mrb[0].mxu0 %v405
      %v484 = vpop.f32.mrb[0].mxu0
      %v485 = vadd.f32 %v309, %v484
      %v486 = vpop.f32.mrb[0].mxu0
      %v487 = vadd.f32 %v313, %v486
      %v488 = vpop.f32.mrb[0].mxu0
      %v489 = vadd.f32 %v309, %v488
      %v490 = vpop.f32.mrb[0].mxu0
      %v491 = vadd.f32 %v313, %v490
      %492 = vdwg.mxu0
      %v493 = vsub.f32 0.0, %v442
      %v494 = vsub.f32 0.0, %v444
      %v495 = vsub.f32 0.0, %v485
      %v496 = vsub.f32 0.0, %v487
      %v497 = vsub.f32 0.0, %v446
      %v498 = vsub.f32 0.0, %v448
      %v499 = vsub.f32 0.0, %v489
      %v500 = vsub.f32 0.0, %v491
      %v501 = vmul.f32 %v493, 1.442695
      %v502 = vpow.pop %v501
      %v503 = vmul.f32 %v494, 1.442695
      %v504 = vpow.pop %v503
      %v505 = vmul.f32 %v495, 1.442695
      %v506 = vpow.pop %v505
      %v507 = vmul.f32 %v496, 1.442695
      %v508 = vpow.pop %v507
      %v509 = vmul.f32 %v497, 1.442695
      %v510 = vpow.pop %v509
      %v511 = vmul.f32 %v498, 1.442695
      %v512 = vpow.pop %v511
      %v513 = vmul.f32 %v499, 1.442695
      %v514 = vpow.pop %v513
      %v515 = vmul.f32 %v500, 1.442695
      %v516 = vpow.pop %v515
      %v517 = vadd.f32 %v502, 1.0
      %v518 = vadd.f32 %v504, 1.0
      %v519 = vadd.f32 %v506, 1.0
      %v520 = vadd.f32 %v508, 1.0
      %v521 = vadd.f32 %v510, 1.0
      %v522 = vadd.f32 %v512, 1.0
      %v523 = vadd.f32 %v514, 1.0
      %v524 = vadd.f32 %v516, 1.0
      %v525 = vrcp.pop %v517
      %v526 = vrcp.pop %v518
      %v527 = vrcp.pop %v519
      %v528 = vrcp.pop %v520
      %v529 = vrcp.pop %v521
      %v530 = vrcp.pop %v522
      %v531 = vrcp.pop %v523
      %v532 = vrcp.pop %v524
      %v533 = vmul.f32 %v442, %v525
      %v534 = vmul.f32 %v444, %v526
      %v535 = vmul.f32 %v485, %v527
      %v536 = vmul.f32 %v487, %v528
      %v537 = vmul.f32 %v446, %v529
      %v538 = vmul.f32 %v448, %v530
      %v539 = vmul.f32 %v489, %v531
      %v540 = vmul.f32 %v491, %v532
      %v541 = vld [vmem:[%s269] sm:$0xf]
      %v542 = vld [vmem:[%s269 + $0x4] sm:$0xf]
      %v543 = vld [vmem:[%s4] sm:$0xff]
      %v544 = vld [vmem:[%s4 + $0x8] sm:$0xff]
      %v545 = vld [vmem:[%s4 + $0x10] sm:$0xff]
      %v546 = vld [vmem:[%s4 + $0x18] sm:$0xff]
      %v547 = vld [vmem:[%s4 + $0x20] sm:$0xff]
      %v548 = vld [vmem:[%s4 + $0x28] sm:$0xff]
      %v549 = vld [vmem:[%s4 + $0x30] sm:$0xff]
      %v550 = vld [vmem:[%s4 + $0x38] sm:$0xff]
      %v551 = vld [vmem:[%s4 + $0x40] sm:$0xff]
      %v552 = vld [vmem:[%s4 + $0x48] sm:$0xff]
      %v553 = vld [vmem:[%s4 + $0x50] sm:$0xff]
      %v554 = vld [vmem:[%s4 + $0x58] sm:$0xff]
      %v555 = vld [vmem:[%s4 + $0x60] sm:$0xff]
      %v556 = vld [vmem:[%s4 + $0x68] sm:$0xff]
      %v557 = vld [vmem:[%s4 + $0x70] sm:$0xff]
      %v558 = vld [vmem:[%s4 + $0x78] sm:$0xff]
      %v559 = vld [vmem:[%s4 + $0x80] sm:$0xff]
      %v560 = vld [vmem:[%s4 + $0x88] sm:$0xff]
      %v561 = vld [vmem:[%s4 + $0x90] sm:$0xff]
      %v562 = vld [vmem:[%s4 + $0x98] sm:$0xff]
      %v563 = vld [vmem:[%s4 + $0xa0] sm:$0xff]
      %v564 = vld [vmem:[%s4 + $0xa8] sm:$0xff]
      %v565 = vld [vmem:[%s4 + $0xb0] sm:$0xff]
      %v566 = vld [vmem:[%s4 + $0xb8] sm:$0xff]
      %v567 = vld [vmem:[%s4 + $0xc0] sm:$0xff]
      %v568 = vld [vmem:[%s4 + $0xc8] sm:$0xff]
      %v569 = vld [vmem:[%s4 + $0xd0] sm:$0xff]
      %v570 = vld [vmem:[%s4 + $0xd8] sm:$0xff]
      %v571 = vld [vmem:[%s4 + $0xe0] sm:$0xff]
      %v572 = vld [vmem:[%s4 + $0xe8] sm:$0xff]
      %v573 = vld [vmem:[%s4 + $0xf0] sm:$0xff]
      %v574 = vld [vmem:[%s4 + $0xf8] sm:$0xff]
      %v577 = vunpack.c.l.b16 %v541
      %v578 = vunpack.c.l.b16 %v542
      %v579 = vpack.c.b16 %v578, %v577
      %v613 = vunpack.c.l.b16 %v543
      %v614 = vunpack.c.h.b16 %v543
      %v615 = vunpack.c.l.b16 %v544
      %v616 = vunpack.c.h.b16 %v544
      %v617 = vunpack.c.l.b16 %v545
      %v618 = vunpack.c.h.b16 %v545
      %v619 = vunpack.c.l.b16 %v546
      %v620 = vunpack.c.h.b16 %v546
      %v621 = vunpack.c.l.b16 %v547
      %v622 = vunpack.c.h.b16 %v547
      %v623 = vunpack.c.l.b16 %v548
      %v624 = vunpack.c.h.b16 %v548
      %v625 = vunpack.c.l.b16 %v549
      %v626 = vunpack.c.h.b16 %v549
      %v627 = vunpack.c.l.b16 %v550
      %v628 = vunpack.c.h.b16 %v550
      %v629 = vunpack.c.l.b16 %v551
      %v630 = vunpack.c.h.b16 %v551
      %v631 = vunpack.c.l.b16 %v552
      %v632 = vunpack.c.h.b16 %v552
      %v633 = vunpack.c.l.b16 %v553
      %v634 = vunpack.c.h.b16 %v553
      %v635 = vunpack.c.l.b16 %v554
      %v636 = vunpack.c.h.b16 %v554
      %v637 = vunpack.c.l.b16 %v555
      %v638 = vunpack.c.h.b16 %v555
      %v639 = vunpack.c.l.b16 %v556
      %v640 = vunpack.c.h.b16 %v556
      %v641 = vunpack.c.l.b16 %v557
      %v642 = vunpack.c.h.b16 %v557
      %v643 = vunpack.c.l.b16 %v558
      %v644 = vunpack.c.h.b16 %v558
      %v645 = vunpack.c.l.b16 %v559
      %v646 = vunpack.c.h.b16 %v559
      %v647 = vunpack.c.l.b16 %v560
      %v648 = vunpack.c.h.b16 %v560
      %v649 = vunpack.c.l.b16 %v561
      %v650 = vunpack.c.h.b16 %v561
      %v651 = vunpack.c.l.b16 %v562
      %v652 = vunpack.c.h.b16 %v562
      %v653 = vunpack.c.l.b16 %v563
      %v654 = vunpack.c.h.b16 %v563
      %v655 = vunpack.c.l.b16 %v564
      %v656 = vunpack.c.h.b16 %v564
      %v657 = vunpack.c.l.b16 %v565
      %v658 = vunpack.c.h.b16 %v565
      %v659 = vunpack.c.l.b16 %v566
      %v660 = vunpack.c.h.b16 %v566
      %v661 = vunpack.c.l.b16 %v567
      %v662 = vunpack.c.h.b16 %v567
      %v663 = vunpack.c.l.b16 %v568
      %v664 = vunpack.c.h.b16 %v568
      %v665 = vunpack.c.l.b16 %v569
      %v666 = vunpack.c.h.b16 %v569
      %v667 = vunpack.c.l.b16 %v570
      %v668 = vunpack.c.h.b16 %v570
      %v669 = vunpack.c.l.b16 %v571
      %v670 = vunpack.c.h.b16 %v571
      %v671 = vunpack.c.l.b16 %v572
      %v672 = vunpack.c.h.b16 %v572
      %v673 = vunpack.c.l.b16 %v573
      %v674 = vunpack.c.h.b16 %v573
      %v675 = vunpack.c.l.b16 %v574
      %v676 = vunpack.c.h.b16 %v574
      %v677 = vpack.c.b16 %v617, %v613
      %v678 = vpack.c.b16 %v618, %v614
      %v679 = vpack.c.b16 %v619, %v615
      %v680 = vpack.c.b16 %v620, %v616
      %v681 = vpack.c.b16 %v625, %v621
      %v682 = vpack.c.b16 %v626, %v622
      %v683 = vpack.c.b16 %v627, %v623
      %v684 = vpack.c.b16 %v628, %v624
      %v685 = vpack.c.b16 %v633, %v629
      %v686 = vpack.c.b16 %v634, %v630
      %v687 = vpack.c.b16 %v635, %v631
      %v688 = vpack.c.b16 %v636, %v632
      %v689 = vpack.c.b16 %v641, %v637
      %v690 = vpack.c.b16 %v642, %v638
      %v691 = vpack.c.b16 %v643, %v639
      %v692 = vpack.c.b16 %v644, %v640
      %v693 = vpack.c.b16 %v649, %v645
      %v694 = vpack.c.b16 %v650, %v646
      %v695 = vpack.c.b16 %v651, %v647
      %v696 = vpack.c.b16 %v652, %v648
      %v697 = vpack.c.b16 %v657, %v653
      %v698 = vpack.c.b16 %v658, %v654
      %v699 = vpack.c.b16 %v659, %v655
      %v700 = vpack.c.b16 %v660, %v656
      %v701 = vpack.c.b16 %v665, %v661
      %v702 = vpack.c.b16 %v666, %v662
      %v703 = vpack.c.b16 %v667, %v663
      %v704 = vpack.c.b16 %v668, %v664
      %v705 = vpack.c.b16 %v673, %v669
      %v706 = vpack.c.b16 %v674, %v670
      %v707 = vpack.c.b16 %v675, %v671
      %v708 = vpack.c.b16 %v676, %v672
      %741 = vmatprep.subr.bf16.mxu0 %v678
      %742 = vmatpush1.bf16.msra.mxu0 %v677
      %743 = vmatprep.subr.bf16.mxu0 %v682
      %744 = vmatpush1.bf16.msra.mxu0 %v681
      %745 = vmatprep.subr.bf16.mxu0 %v686
      %746 = vmatpush1.bf16.msra.mxu0 %v685
      %747 = vmatprep.subr.bf16.mxu0 %v690
      %748 = vmatpush1.bf16.msra.mxu0 %v689
      %749 = vmatprep.subr.bf16.mxu0 %v694
      %750 = vmatpush1.bf16.msra.mxu0 %v693
      %751 = vmatprep.subr.bf16.mxu0 %v698
      %752 = vmatpush1.bf16.msra.mxu0 %v697
      %753 = vmatprep.subr.bf16.mxu0 %v702
      %754 = vmatpush1.bf16.msra.mxu0 %v701
      %755 = vmatprep.subr.bf16.mxu0 %v706
      %756 = vmatpush1.bf16.msra.mxu0 %v705
      %757 = vmatprep.subr.bf16.mxu0 0
      %758 = vmatpush1.bf16.msra.mxu0 0
      %759 = vmatprep.subr.bf16.mxu0 0
      %760 = vmatpush1.bf16.msra.mxu0 0
      %761 = vmatprep.subr.bf16.mxu0 0
      %762 = vmatpush1.bf16.msra.mxu0 0
      %763 = vmatprep.subr.bf16.mxu0 0
      %764 = vmatpush1.bf16.msra.mxu0 0
      %765 = vmatprep.subr.bf16.mxu0 0
      %766 = vmatpush1.bf16.msra.mxu0 0
      %767 = vmatprep.subr.bf16.mxu0 0
      %768 = vmatpush1.bf16.msra.mxu0 0
      %769 = vmatprep.subr.bf16.mxu0 0
      %770 = vmatpush1.bf16.msra.mxu0 0
      %771 = vmatprep.subr.bf16.mxu0 0
      %772 = vmatpush1.bf16.msra.mxu0 0
      %773 = vmatprep.mubr.bf16.mxu0 0
      %774 = vmatmul.mubr.bf16.gmra.mrb[0].mxu0 %v579
      %v775 = vpop.f32.mrb[0].mxu0
      %v776 = vadd.f32 0.0, %v775
      %v777 = vpop.f32.mrb[0].mxu0
      %v778 = vadd.f32 0.0, %v777
      %v779 = vpop.f32.mrb[0].mxu0
      %v780 = vadd.f32 0.0, %v779
      %v781 = vpop.f32.mrb[0].mxu0
      %v782 = vadd.f32 0.0, %v781
      %783 = vdwg.mxu0
      %784 = vmatprep.subr.bf16.mxu0 %v680
      %785 = vmatpush1.bf16.msra.mxu0 %v679
      %786 = vmatprep.subr.bf16.mxu0 %v684
      %787 = vmatpush1.bf16.msra.mxu0 %v683
      %788 = vmatprep.subr.bf16.mxu0 %v688
      %789 = vmatpush1.bf16.msra.mxu0 %v687
      %790 = vmatprep.subr.bf16.mxu0 %v692
      %791 = vmatpush1.bf16.msra.mxu0 %v691
      %792 = vmatprep.subr.bf16.mxu0 %v696
      %793 = vmatpush1.bf16.msra.mxu0 %v695
      %794 = vmatprep.subr.bf16.mxu0 %v700
      %795 = vmatpush1.bf16.msra.mxu0 %v699
      %796 = vmatprep.subr.bf16.mxu0 %v704
      %797 = vmatpush1.bf16.msra.mxu0 %v703
      %798 = vmatprep.subr.bf16.mxu0 %v708
      %799 = vmatpush1.bf16.msra.mxu0 %v707
      %800 = vmatprep.subr.bf16.mxu0 0
      %801 = vmatpush1.bf16.msra.mxu0 0
      %802 = vmatprep.subr.bf16.mxu0 0
      %803 = vmatpush1.bf16.msra.mxu0 0
      %804 = vmatprep.subr.bf16.mxu0 0
      %805 = vmatpush1.bf16.msra.mxu0 0
      %806 = vmatprep.subr.bf16.mxu0 0
      %807 = vmatpush1.bf16.msra.mxu0 0
      %808 = vmatprep.subr.bf16.mxu0 0
      %809 = vmatpush1.bf16.msra.mxu0 0
      %810 = vmatprep.subr.bf16.mxu0 0
      %811 = vmatpush1.bf16.msra.mxu0 0
      %812 = vmatprep.subr.bf16.mxu0 0
      %813 = vmatpush1.bf16.msra.mxu0 0
      %814 = vmatprep.subr.bf16.mxu0 0
      %815 = vmatpush1.bf16.msra.mxu0 0
      %816 = vmatprep.mubr.bf16.mxu0 0
      %817 = vmatmul.mubr.bf16.gmra.mrb[0].mxu0 %v579
      %v818 = vpop.f32.mrb[0].mxu0
      %v819 = vadd.f32 0.0, %v818
      %v820 = vpop.f32.mrb[0].mxu0
      %v821 = vadd.f32 0.0, %v820
      %v822 = vpop.f32.mrb[0].mxu0
      %v823 = vadd.f32 0.0, %v822
      %v824 = vpop.f32.mrb[0].mxu0
      %v825 = vadd.f32 0.0, %v824
      %826 = vdwg.mxu0
      %v827 = vmul.f32 %v776, %v533
      %v828 = vmul.f32 %v778, %v534
      %v829 = vmul.f32 %v819, %v535
      %v830 = vmul.f32 %v821, %v536
      %v831 = vmul.f32 %v780, %v537
      %v832 = vmul.f32 %v782, %v538
      %v833 = vmul.f32 %v823, %v539
      %v834 = vmul.f32 %v825, %v540
      %v835 = vpack.c.bf16 %v831, %v827
      %v836 = vpack.c.bf16 %v832, %v828
      %v837 = vpack.c.bf16 %v833, %v829
      %v838 = vpack.c.bf16 %v834, %v830
      %v839 = vld [vmem:[%s5] sm:$0xf]
      %v840 = vld [vmem:[%s5 + $0x4] sm:$0xf]
      %v841 = vld [vmem:[%s5 + $0x8] sm:$0xf]
      %v842 = vld [vmem:[%s5 + $0xc] sm:$0xf]
      %v843 = vld [vmem:[%s5 + $0x10] sm:$0xf]
      %v844 = vld [vmem:[%s5 + $0x14] sm:$0xf]
      %v845 = vld [vmem:[%s5 + $0x18] sm:$0xf]
      %v846 = vld [vmem:[%s5 + $0x1c] sm:$0xf]
      %v847 = vld [vmem:[%s5 + $0x20] sm:$0xf]
      %v848 = vld [vmem:[%s5 + $0x24] sm:$0xf]
      %v849 = vld [vmem:[%s5 + $0x28] sm:$0xf]
      %v850 = vld [vmem:[%s5 + $0x2c] sm:$0xf]
      %v851 = vld [vmem:[%s5 + $0x30] sm:$0xf]
      %v852 = vld [vmem:[%s5 + $0x34] sm:$0xf]
      %v853 = vld [vmem:[%s5 + $0x38] sm:$0xf]
      %v854 = vld [vmem:[%s5 + $0x3c] sm:$0xf]
      %v855 = vld [vmem:[%s5 + $0x40] sm:$0xf]
      %v856 = vld [vmem:[%s5 + $0x44] sm:$0xf]
      %v857 = vld [vmem:[%s5 + $0x48] sm:$0xf]
      %v858 = vld [vmem:[%s5 + $0x4c] sm:$0xf]
      %v859 = vld [vmem:[%s5 + $0x50] sm:$0xf]
      %v860 = vld [vmem:[%s5 + $0x54] sm:$0xf]
      %v861 = vld [vmem:[%s5 + $0x58] sm:$0xf]
      %v862 = vld [vmem:[%s5 + $0x5c] sm:$0xf]
      %v863 = vld [vmem:[%s5 + $0x60] sm:$0xf]
      %v864 = vld [vmem:[%s5 + $0x64] sm:$0xf]
      %v865 = vld [vmem:[%s5 + $0x68] sm:$0xf]
      %v866 = vld [vmem:[%s5 + $0x6c] sm:$0xf]
      %v867 = vld [vmem:[%s5 + $0x70] sm:$0xf]
      %v868 = vld [vmem:[%s5 + $0x74] sm:$0xf]
      %v869 = vld [vmem:[%s5 + $0x78] sm:$0xf]
      %v870 = vld [vmem:[%s5 + $0x7c] sm:$0xf]
      %v871 = vld [vmem:[%s5 + $0x80] sm:$0xf]
      %v872 = vld [vmem:[%s5 + $0x84] sm:$0xf]
      %v873 = vld [vmem:[%s5 + $0x88] sm:$0xf]
      %v874 = vld [vmem:[%s5 + $0x8c] sm:$0xf]
      %v875 = vld [vmem:[%s5 + $0x90] sm:$0xf]
      %v876 = vld [vmem:[%s5 + $0x94] sm:$0xf]
      %v877 = vld [vmem:[%s5 + $0x98] sm:$0xf]
      %v878 = vld [vmem:[%s5 + $0x9c] sm:$0xf]
      %v879 = vld [vmem:[%s5 + $0xa0] sm:$0xf]
      %v880 = vld [vmem:[%s5 + $0xa4] sm:$0xf]
      %v881 = vld [vmem:[%s5 + $0xa8] sm:$0xf]
      %v882 = vld [vmem:[%s5 + $0xac] sm:$0xf]
      %v883 = vld [vmem:[%s5 + $0xb0] sm:$0xf]
      %v884 = vld [vmem:[%s5 + $0xb4] sm:$0xf]
      %v885 = vld [vmem:[%s5 + $0xb8] sm:$0xf]
      %v886 = vld [vmem:[%s5 + $0xbc] sm:$0xf]
      %v887 = vld [vmem:[%s5 + $0xc0] sm:$0xf]
      %v888 = vld [vmem:[%s5 + $0xc4] sm:$0xf]
      %v889 = vld [vmem:[%s5 + $0xc8] sm:$0xf]
      %v890 = vld [vmem:[%s5 + $0xcc] sm:$0xf]
      %v891 = vld [vmem:[%s5 + $0xd0] sm:$0xf]
      %v892 = vld [vmem:[%s5 + $0xd4] sm:$0xf]
      %v893 = vld [vmem:[%s5 + $0xd8] sm:$0xf]
      %v894 = vld [vmem:[%s5 + $0xdc] sm:$0xf]
      %v895 = vld [vmem:[%s5 + $0xe0] sm:$0xf]
      %v896 = vld [vmem:[%s5 + $0xe4] sm:$0xf]
      %v897 = vld [vmem:[%s5 + $0xe8] sm:$0xf]
      %v898 = vld [vmem:[%s5 + $0xec] sm:$0xf]
      %v899 = vld [vmem:[%s5 + $0xf0] sm:$0xf]
      %v900 = vld [vmem:[%s5 + $0xf4] sm:$0xf]
      %v901 = vld [vmem:[%s5 + $0xf8] sm:$0xf]
      %v902 = vld [vmem:[%s5 + $0xfc] sm:$0xf]
      %v967 = vunpack.c.l.b16 %v839
      %v968 = vunpack.c.l.b16 %v840
      %v969 = vunpack.c.l.b16 %v841
      %v970 = vunpack.c.l.b16 %v842
      %v971 = vunpack.c.l.b16 %v843
      %v972 = vunpack.c.l.b16 %v844
      %v973 = vunpack.c.l.b16 %v845
      %v974 = vunpack.c.l.b16 %v846
      %v975 = vunpack.c.l.b16 %v847
      %v976 = vunpack.c.l.b16 %v848
      %v977 = vunpack.c.l.b16 %v849
      %v978 = vunpack.c.l.b16 %v850
      %v979 = vunpack.c.l.b16 %v851
      %v980 = vunpack.c.l.b16 %v852
      %v981 = vunpack.c.l.b16 %v853
      %v982 = vunpack.c.l.b16 %v854
      %v983 = vunpack.c.l.b16 %v855
      %v984 = vunpack.c.l.b16 %v856
      %v985 = vunpack.c.l.b16 %v857
      %v986 = vunpack.c.l.b16 %v858
      %v987 = vunpack.c.l.b16 %v859
      %v988 = vunpack.c.l.b16 %v860
      %v989 = vunpack.c.l.b16 %v861
      %v990 = vunpack.c.l.b16 %v862
      %v991 = vunpack.c.l.b16 %v863
      %v992 = vunpack.c.l.b16 %v864
      %v993 = vunpack.c.l.b16 %v865
      %v994 = vunpack.c.l.b16 %v866
      %v995 = vunpack.c.l.b16 %v867
      %v996 = vunpack.c.l.b16 %v868
      %v997 = vunpack.c.l.b16 %v869
      %v998 = vunpack.c.l.b16 %v870
      %v999 = vunpack.c.l.b16 %v871
      %v1000 = vunpack.c.l.b16 %v872
      %v1001 = vunpack.c.l.b16 %v873
      %v1002 = vunpack.c.l.b16 %v874
      %v1003 = vunpack.c.l.b16 %v875
      %v1004 = vunpack.c.l.b16 %v876
      %v1005 = vunpack.c.l.b16 %v877
      %v1006 = vunpack.c.l.b16 %v878
      %v1007 = vunpack.c.l.b16 %v879
      %v1008 = vunpack.c.l.b16 %v880
      %v1009 = vunpack.c.l.b16 %v881
      %v1010 = vunpack.c.l.b16 %v882
      %v1011 = vunpack.c.l.b16 %v883
      %v1012 = vunpack.c.l.b16 %v884
      %v1013 = vunpack.c.l.b16 %v885
      %v1014 = vunpack.c.l.b16 %v886
      %v1015 = vunpack.c.l.b16 %v887
      %v1016 = vunpack.c.l.b16 %v888
      %v1017 = vunpack.c.l.b16 %v889
      %v1018 = vunpack.c.l.b16 %v890
      %v1019 = vunpack.c.l.b16 %v891
      %v1020 = vunpack.c.l.b16 %v892
      %v1021 = vunpack.c.l.b16 %v893
      %v1022 = vunpack.c.l.b16 %v894
      %v1023 = vunpack.c.l.b16 %v895
      %v1024 = vunpack.c.l.b16 %v896
      %v1025 = vunpack.c.l.b16 %v897
      %v1026 = vunpack.c.l.b16 %v898
      %v1027 = vunpack.c.l.b16 %v899
      %v1028 = vunpack.c.l.b16 %v900
      %v1029 = vunpack.c.l.b16 %v901
      %v1030 = vunpack.c.l.b16 %v902
      %v1031 = vpack.c.b16 %v968, %v967
      %v1032 = vpack.c.b16 %v970, %v969
      %v1033 = vpack.c.b16 %v972, %v971
      %v1034 = vpack.c.b16 %v974, %v973
      %v1035 = vpack.c.b16 %v976, %v975
      %v1036 = vpack.c.b16 %v978, %v977
      %v1037 = vpack.c.b16 %v980, %v979
      %v1038 = vpack.c.b16 %v982, %v981
      %v1039 = vpack.c.b16 %v984, %v983
      %v1040 = vpack.c.b16 %v986, %v985
      %v1041 = vpack.c.b16 %v988, %v987
      %v1042 = vpack.c.b16 %v990, %v989
      %v1043 = vpack.c.b16 %v992, %v991
      %v1044 = vpack.c.b16 %v994, %v993
      %v1045 = vpack.c.b16 %v996, %v995
      %v1046 = vpack.c.b16 %v998, %v997
      %v1047 = vpack.c.b16 %v1000, %v999
      %v1048 = vpack.c.b16 %v1002, %v1001
      %v1049 = vpack.c.b16 %v1004, %v1003
      %v1050 = vpack.c.b16 %v1006, %v1005
      %v1051 = vpack.c.b16 %v1008, %v1007
      %v1052 = vpack.c.b16 %v1010, %v1009
      %v1053 = vpack.c.b16 %v1012, %v1011
      %v1054 = vpack.c.b16 %v1014, %v1013
      %v1055 = vpack.c.b16 %v1016, %v1015
      %v1056 = vpack.c.b16 %v1018, %v1017
      %v1057 = vpack.c.b16 %v1020, %v1019
      %v1058 = vpack.c.b16 %v1022, %v1021
      %v1059 = vpack.c.b16 %v1024, %v1023
      %v1060 = vpack.c.b16 %v1026, %v1025
      %v1061 = vpack.c.b16 %v1028, %v1027
      %v1062 = vpack.c.b16 %v1030, %v1029
      %1095 = vmatprep.subr.bf16.mxu0 0
      %1096 = vmatpush1.bf16.msra.mxu0 %v1031
      %1097 = vmatprep.subr.bf16.mxu0 0
      %1098 = vmatpush1.bf16.msra.mxu0 %v1032
      %1099 = vmatprep.subr.bf16.mxu0 0
      %1100 = vmatpush1.bf16.msra.mxu0 %v1033
      %1101 = vmatprep.subr.bf16.mxu0 0
      %1102 = vmatpush1.bf16.msra.mxu0 %v1034
      %1103 = vmatprep.subr.bf16.mxu0 0
      %1104 = vmatpush1.bf16.msra.mxu0 %v1035
      %1105 = vmatprep.subr.bf16.mxu0 0
      %1106 = vmatpush1.bf16.msra.mxu0 %v1036
      %1107 = vmatprep.subr.bf16.mxu0 0
      %1108 = vmatpush1.bf16.msra.mxu0 %v1037
      %1109 = vmatprep.subr.bf16.mxu0 0
      %1110 = vmatpush1.bf16.msra.mxu0 %v1038
      %1111 = vmatprep.subr.bf16.mxu0 0
      %1112 = vmatpush1.bf16.msra.mxu0 %v1039
      %1113 = vmatprep.subr.bf16.mxu0 0
      %1114 = vmatpush1.bf16.msra.mxu0 %v1040
      %1115 = vmatprep.subr.bf16.mxu0 0
      %1116 = vmatpush1.bf16.msra.mxu0 %v1041
      %1117 = vmatprep.subr.bf16.mxu0 0
      %1118 = vmatpush1.bf16.msra.mxu0 %v1042
      %1119 = vmatprep.subr.bf16.mxu0 0
      %1120 = vmatpush1.bf16.msra.mxu0 %v1043
      %1121 = vmatprep.subr.bf16.mxu0 0
      %1122 = vmatpush1.bf16.msra.mxu0 %v1044
      %1123 = vmatprep.subr.bf16.mxu0 0
      %1124 = vmatpush1.bf16.msra.mxu0 %v1045
      %1125 = vmatprep.subr.bf16.mxu0 0
      %1126 = vmatpush1.bf16.msra.mxu0 %v1046
      %1127 = vmatprep.mubr.bf16.mxu0 %v836
      %1128 = vmatmul.mubr.bf16.gmra.mrb[0].mxu0 %v835
      %v1129 = vpop.f32.mrb[0].mxu0
      %v1130 = vadd.f32 0.0, %v1129
      %v1131 = vpop.f32.mrb[0].mxu0
      %v1132 = vpop.f32.mrb[0].mxu0
      %v1133 = vadd.f32 0.0, %v1132
      %v1134 = vpop.f32.mrb[0].mxu0
      %1135 = vdwg.mxu0
      %1136 = vmatprep.subr.bf16.mxu0 0
      %1137 = vmatpush1.bf16.msra.mxu0 %v1047
      %1138 = vmatprep.subr.bf16.mxu0 0
      %1139 = vmatpush1.bf16.msra.mxu0 %v1048
      %1140 = vmatprep.subr.bf16.mxu0 0
      %1141 = vmatpush1.bf16.msra.mxu0 %v1049
      %1142 = vmatprep.subr.bf16.mxu0 0
      %1143 = vmatpush1.bf16.msra.mxu0 %v1050
      %1144 = vmatprep.subr.bf16.mxu0 0
      %1145 = vmatpush1.bf16.msra.mxu0 %v1051
      %1146 = vmatprep.subr.bf16.mxu0 0
      %1147 = vmatpush1.bf16.msra.mxu0 %v1052
      %1148 = vmatprep.subr.bf16.mxu0 0
      %1149 = vmatpush1.bf16.msra.mxu0 %v1053
      %1150 = vmatprep.subr.bf16.mxu0 0
      %1151 = vmatpush1.bf16.msra.mxu0 %v1054
      %1152 = vmatprep.subr.bf16.mxu0 0
      %1153 = vmatpush1.bf16.msra.mxu0 %v1055
      %1154 = vmatprep.subr.bf16.mxu0 0
      %1155 = vmatpush1.bf16.msra.mxu0 %v1056
      %1156 = vmatprep.subr.bf16.mxu0 0
      %1157 = vmatpush1.bf16.msra.mxu0 %v1057
      %1158 = vmatprep.subr.bf16.mxu0 0
      %1159 = vmatpush1.bf16.msra.mxu0 %v1058
      %1160 = vmatprep.subr.bf16.mxu0 0
      %1161 = vmatpush1.bf16.msra.mxu0 %v1059
      %1162 = vmatprep.subr.bf16.mxu0 0
      %1163 = vmatpush1.bf16.msra.mxu0 %v1060
      %1164 = vmatprep.subr.bf16.mxu0 0
      %1165 = vmatpush1.bf16.msra.mxu0 %v1061
      %1166 = vmatprep.subr.bf16.mxu0 0
      %1167 = vmatpush1.bf16.msra.mxu0 %v1062
      %1168 = vmatprep.mubr.bf16.mxu0 %v838
      %1169 = vmatmul.mubr.bf16.gmra.mrb[0].mxu0 %v837
      %v1170 = vpop.f32.mrb[0].mxu0
      %v1171 = vadd.f32 %v1130, %v1170
      %v1172 = vpop.f32.mrb[0].mxu0
      %v1173 = vpop.f32.mrb[0].mxu0
      %v1174 = vadd.f32 %v1133, %v1173
      %v1175 = vpop.f32.mrb[0].mxu0
      %1176 = vdwg.mxu0
      %1177 = vst [vmem:[%s275] sm:$0xff] %v1171
      %1178 = vst [vmem:[%s275 + $0x8] sm:$0xff] %v1174
      %s1179 = smul.u32 2, %s17
      %p1180 = scmp.lt.s32.totalorder %s1179, 7
      %s1181 = scalar_select %p1180, %s1179, 7
      %s1182 = smul.addr %s1181, 8
      %s1183 = scalar_lea.vmem %s6, %s1182
      // Predicated region
      $region45: #{_lambda_.1} parent=43 // pred_check
        %p1184 = pneg %p171
      $region46: #{_lambda_.1} parent=43 // pred_check_branch
        %1186 = sbr.rel (%p1184) target = $region48
      $region47: #{_lambda_.1} parent=43 // pred_region
        %s1187 = smul.u32 2, %s17
      $region48: #{_lambda_.1} parent=43 // pred_fallthru
        _
    $region44: #{_lambda_.1} parent=5 // pred_fallthru
      _
    %p1188 = scmp.le.s32.totalorder 2, %s12
    // Predicated region
    $region49: #{_lambda_.1} parent=5 // pred_check
      %p1189 = pneg %p1188
    $region50: #{_lambda_.1} parent=5 // pred_check_branch
      %1191 = sbr.rel (%p1189) target = $region52
    $region51: #{_lambda_.1} parent=5 // pred_region
      %s1192 = ssub.s32 %s12, 2
      // Predicated region
      $region53: #{_lambda_.1} parent=51 // pred_check
        %p1193 = pneg %p177
      $region54: #{_lambda_.1} parent=51 // pred_check_branch
        %1195 = sbr.rel (%p1193) target = $region56
      $region55: #{_lambda_.1} parent=51 // pred_region
        %s1196 = smul.u32 2, %s18
        %p1197 = scmp.lt.s32.totalorder %s1196, 7
        %s1198 = scalar_select %p1197, %s1196, 7
        %s1199 = smul.addr %s1198, 8
        %s1200 = scalar_lea.vmem %s6, %s1199
      $region56: #{_lambda_.1} parent=51 // pred_fallthru
        _
    $region52: #{_lambda_.1} parent=5 // pred_fallthru
      _
  $region6: #{_lambda_.1} parent=0 // loop_footer
    %s16 = sadd.s32 1, %s12
  $region7: #{_lambda_.1} parent=0 // loop_footer_branch
    %11 = sbr.rel target = $region3
  $region8: #{_lambda_.1} parent=0 // loop_exit
    _

</llo_original>
